<compile_context>
chip_gen: v5e
topology: v5e:2x2
jax: 0.10.0
libtpu: 0.0.40
codegen_flags: <defaults>
</compile_context>

<pallas_src>
import functools

import jax
import jax.numpy as jnp
from jax import lax
from jax.experimental import pallas as pl
from jax.experimental.pallas import tpu as pltpu

C_CH = 128   # in_channels == out_channels == groups
KSZ = 3      # kernel_size
PAD = 1      # padding
LANE = 128   # TPU lane width (minimum lane-dim block)


def dw_kernel(x_ref, lh_ref, rh_ref, w_ref, b_ref, o_ref, *, L, TL, rem):
    """One (batch, L-tile) grid step of the depthwise conv.

    x_ref : (1, C, TL)   centre tile, channels on sublanes, L on lanes
    lh_ref: (1, C, 128)  128-wide block containing the left-halo column
    rh_ref: (1, C, 128)  128-wide block containing the right-halo column
    w_ref : (K, C, 1)    per-channel taps
    b_ref : (C, 1)       per-channel bias
    o_ref : (1, C, TL)   output tile
    rem   : static length of the last tile's valid region (L - (num_tiles-1)*TL)
    """
    j = pl.program_id(1)
    TPB = TL // LANE

    # Per-channel taps / bias, hoisted once per tile (lane-broadcast on the VPU).
    w0 = w_ref[0].astype(jnp.float32)                       # (C, 1)
    w1 = w_ref[1].astype(jnp.float32)
    w2 = w_ref[2].astype(jnp.float32)
    b = b_ref[...].astype(jnp.float32)                      # (C, 1)

    # Halo columns for the first / last chunk of this tile (zero == conv padding).
    lcol = jnp.where(j > 0,
                     lh_ref[0, :, LANE - 1:LANE].astype(jnp.float32), 0.0)
    rcol = jnp.where((j + 1) * TL < L,
                     rh_ref[0, :, 0:1].astype(jnp.float32), 0.0)

    lane = lax.broadcasted_iota(jnp.int32, (1, LANE), 1)

    # Chunk the tile into 128-lane sub-blocks so each roll->patch->FMA chain
    # stays in vregs (no full-tile temporaries -> no VMEM spill on v7x/big TL).
    for bidx in range(TPB):
        lo = bidx * LANE
        xc = x_ref[0, :, lo:lo + LANE].astype(jnp.float32)   # (C, 128)

        # Zero columns past L only in the single chunk (statically known) that
        # can straddle the ragged array end; interior chunks skip the mask.
        if lo < rem < lo + LANE:
            xc = jnp.where(lane + j * TL + lo < L, xc, 0.0)

        # Column to the left of this chunk (previous chunk / left halo).
        if bidx == 0:
            lc = lcol
        else:
            lc = x_ref[0, :, lo - 1:lo].astype(jnp.float32)

        # Column to the right of this chunk (next chunk / right halo).
        if bidx == TPB - 1:
            rc = rcol
        else:
            rc = x_ref[0, :, lo + LANE:lo + LANE + 1].astype(jnp.float32)
            if lo < rem <= lo + LANE:  # neighbour column may sit past L
                rc = jnp.where(j * TL + lo + LANE < L, rc, 0.0)

        # +/-1 spatial shifts via XLU lane rotation; patch only the wrapped column.
        x_m1 = pltpu.roll(xc, shift=1, axis=1)               # value at l-1
        x_m1 = jnp.where(lane == 0, lc, x_m1)
        x_p1 = pltpu.roll(xc, shift=LANE - 1, axis=1)        # value at l+1
        x_p1 = jnp.where(lane == LANE - 1, rc, x_p1)

        acc = x_m1 * w0 + b                                  # bias folded into tap 0
        acc = acc + xc * w1
        acc = acc + x_p1 * w2
        o_ref[0, :, lo:lo + LANE] = acc.astype(o_ref.dtype)


def depthwise_conv1d(x_ncl, weight, bias, *, tile_l=2048):
    """Matches torch.nn.Conv1d(128, 128, 3, padding=1, groups=128).

    x_ncl : (N, 128, L)  float, PyTorch NCL layout (kept end-to-end)
    weight: (128, 1, 3)  (out_ch, in_ch/groups, k)
    bias  : (128,)
    returns (N, 128, L)
    """
    N, C, L = x_ncl.shape
    assert C == C_CH
    itemsize = jnp.dtype(x_ncl.dtype).itemsize

    NB = -(-L // LANE)                   # number of 128-lane blocks along L
    tl_cap = NB * LANE
    TL = max(LANE, (min(int(tile_l), tl_cap) // LANE) * LANE)
    # v7x megacore: with a single batch, keep >= 2 L-tiles so both TCs get work.
    if N == 1 and NB > 1 and TL >= tl_cap:
        TL = ((NB + 1) // 2) * LANE
    num_tiles = -(-L // TL)
    TPB = TL // LANE                     # 128-blocks per tile
    rem = L - (num_tiles - 1) * TL       # valid length of the last tile

    # Tiny parameter reshapes (parameters, not activation traffic).
    w_kc1 = jnp.transpose(weight, (2, 0, 1)).astype(x_ncl.dtype)   # (K, C, 1)
    b_c1 = bias.reshape(C, 1).astype(x_ncl.dtype)                  # (C, 1)

    kernel = functools.partial(dw_kernel, L=L, TL=TL, rem=rem)

    # Scoped-VMEM budget: centre in/out double-buffered + halos + params + margin.
    blk_bytes = C * TL * itemsize
    vmem_need = (2 * 2 * blk_bytes                     # centre in + out, 2 buffers
                 + 2 * 2 * C * LANE * itemsize         # two halo blocks, 2 buffers
                 + (KSZ + 1) * C * LANE * itemsize     # padded taps + bias
                 + (8 << 20))                          # headroom for scratch/spill
    vmem_limit = int(min(max(vmem_need, 32 << 20), 64 << 20))

    return pl.pallas_call(
        kernel,
        out_shape=jax.ShapeDtypeStruct((N, C, L), x_ncl.dtype),
        grid=(N, num_tiles),
        in_specs=[
            # centre tile
            pl.BlockSpec((1, C, TL), lambda n, j: (n, 0, j)),
            # 128-wide block holding the left-halo column (clamped at the edge)
            pl.BlockSpec((1, C, LANE),
                         lambda n, j: (n, 0, jnp.maximum(j * TPB - 1, 0))),
            # 128-wide block holding the right-halo column (clamped at the edge)
            pl.BlockSpec((1, C, LANE),
                         lambda n, j: (n, 0, jnp.minimum((j + 1) * TPB, NB - 1))),
            # constant-index params: fetched once, revolving buffer reuses them
            pl.BlockSpec((KSZ, C, 1), lambda n, j: (0, 0, 0)),
            pl.BlockSpec((C, 1), lambda n, j: (0, 0)),
        ],
        out_specs=pl.BlockSpec((1, C, TL), lambda n, j: (n, 0, j)),
        compiler_params=pltpu.CompilerParams(
            dimension_semantics=("parallel", "parallel"),
            vmem_limit_bytes=vmem_limit),
    )(x_ncl, x_ncl, x_ncl, w_kc1, b_c1)


def _reference(x_ncl, weight, bias):
    """Pure-JAX reference (depthwise conv via grouped conv_general_dilated)."""
    out = lax.conv_general_dilated(
        x_ncl, weight,
        window_strides=(1,),
        padding=((PAD, PAD),),
        dimension_numbers=("NCH", "OIH", "NCH"),
        feature_group_count=C_CH,
        precision=lax.Precision.HIGHEST,
    )
    return out + bias[None, :, None]


if __name__ == "__main__":
    key = jax.random.PRNGKey(0)
    kx, kw, kb, kx2 = jax.random.split(key, 4)

    # Conv1d-style uniform init (bound = 1/sqrt(fan_in * k)).
    bound = 1.0 / jnp.sqrt(1.0 * KSZ)
    weight = jax.random.uniform(kw, (C_CH, 1, KSZ), jnp.float32, -bound, bound)
    bias = jax.random.uniform(kb, (C_CH,), jnp.float32, -bound, bound)

    # Module's example input: (1, 128, 6) -> single partial 128-wide tile.
    x = jax.random.normal(kx, (1, C_CH, 6), dtype=jnp.float32)
    out = jax.block_until_ready(depthwise_conv1d(x, weight, bias))
    assert out.shape == x.shape
    assert jnp.allclose(out, _reference(x, weight, bias), atol=1e-5, rtol=1e-5)

    # Multi-tile ragged case: halos, a straddling chunk, partial last tile.
    # N=2, L=700, TL=256 -> grid (2, 3), TPB=2.
    x2 = jax.random.normal(kx2, (2, C_CH, 700), dtype=jnp.float32)
    out2 = jax.block_until_ready(depthwise_conv1d(x2, weight, bias, tile_l=256))
    assert jnp.allclose(out2, _reference(x2, weight, bias), atol=1e-5, rtol=1e-5)

    # Single-batch aligned case: exercises the >=2-tiles megacore heuristic.
    x3 = jax.random.normal(kx, (1, C_CH, 1024), dtype=jnp.float32)
    out3 = jax.block_until_ready(depthwise_conv1d(x3, weight, bias))
    assert jnp.allclose(out3, _reference(x3, weight, bias), atol=1e-5, rtol=1e-5)

    print("KERNEL_OK")
</pallas_src>

<mosaic_0001>
module attributes {stable_mosaic.version = 11 : i64} {
  func.func @dw_kernel(%arg0: i32, %arg1: i32, %arg2: memref<1x128x128xf32, #tpu.memory_space<vmem>>, %arg3: memref<1x128x128xf32, #tpu.memory_space<vmem>>, %arg4: memref<1x128x128xf32, #tpu.memory_space<vmem>>, %arg5: memref<3x128x1xf32, #tpu.memory_space<vmem>>, %arg6: memref<128x1xf32, #tpu.memory_space<vmem>>, %arg7: memref<1x128x128xf32, #tpu.memory_space<vmem>>) attributes {dimension_semantics = [#tpu.dimension_semantics<parallel>, #tpu.dimension_semantics<parallel>], iteration_bounds = array<i64: 1, 1>, scalar_prefetch = 0 : i64, scratch_operands = 0 : i64, tpu.core_type = #tpu.core_type<tc>, window_params = [{transform_indices = @transform_0, window_bounds = array<i64: 1, 128, 128>}, {transform_indices = @transform_1, window_bounds = array<i64: 1, 128, 128>}, {transform_indices = @transform_2, window_bounds = array<i64: 1, 128, 128>}, {pipeline_mode = #tpu.pipeline_mode<synchronous>, transform_indices = @transform_3, window_bounds = array<i64: 3, 128, 1>}, {pipeline_mode = #tpu.pipeline_mode<synchronous>, transform_indices = @transform_4, window_bounds = array<i64: 128, 1>}, {transform_indices = @transform_5, window_bounds = array<i64: 1, 128, 128>}]} {
    %c0 = arith.constant 0 : index
    %c0_0 = arith.constant 0 : index
    %c0_1 = arith.constant 0 : index
    %0 = vector.load %arg5[%c0, %c0_0, %c0_1] : memref<3x128x1xf32, #tpu.memory_space<vmem>>, vector<1x128x1xf32>
    %1 = vector.shape_cast %0 : vector<1x128x1xf32> to vector<128x1xf32>
    %c1 = arith.constant 1 : index
    %c0_2 = arith.constant 0 : index
    %c0_3 = arith.constant 0 : index
    %2 = vector.load %arg5[%c1, %c0_2, %c0_3] : memref<3x128x1xf32, #tpu.memory_space<vmem>>, vector<1x128x1xf32>
    %3 = vector.shape_cast %2 : vector<1x128x1xf32> to vector<128x1xf32>
    %c2 = arith.constant 2 : index
    %c0_4 = arith.constant 0 : index
    %c0_5 = arith.constant 0 : index
    %4 = vector.load %arg5[%c2, %c0_4, %c0_5] : memref<3x128x1xf32, #tpu.memory_space<vmem>>, vector<1x128x1xf32>
    %5 = vector.shape_cast %4 : vector<1x128x1xf32> to vector<128x1xf32>
    %c0_6 = arith.constant 0 : index
    %c0_7 = arith.constant 0 : index
    %6 = vector.load %arg6[%c0_6, %c0_7] : memref<128x1xf32, #tpu.memory_space<vmem>>, vector<128x1xf32>
    %c0_i32 = arith.constant 0 : i32
    %7 = arith.cmpi sgt, %arg1, %c0_i32 : i32
    %c0_8 = arith.constant 0 : index
    %c0_9 = arith.constant 0 : index
    %c127 = arith.constant 127 : index
    %8 = vector.load %arg3[%c0_8, %c0_9, %c127] : memref<1x128x128xf32, #tpu.memory_space<vmem>>, vector<1x128x1xf32>
    %9 = vector.shape_cast %8 : vector<1x128x1xf32> to vector<128x1xf32>
    %cst = arith.constant 0.000000e+00 : f32
    %10 = vector.broadcast %cst : f32 to vector<128x1xf32>
    %11 = arith.select %7, %9, %10 : vector<128x1xf32>
    %c1_i32 = arith.constant 1 : i32
    %12 = arith.addi %arg1, %c1_i32 : i32
    %c128_i32 = arith.constant 128 : i32
    %13 = arith.muli %12, %c128_i32 : i32
    %c6_i32 = arith.constant 6 : i32
    %14 = arith.cmpi slt, %13, %c6_i32 : i32
    %c0_10 = arith.constant 0 : index
    %c0_11 = arith.constant 0 : index
    %c0_12 = arith.constant 0 : index
    %15 = vector.load %arg4[%c0_10, %c0_11, %c0_12] : memref<1x128x128xf32, #tpu.memory_space<vmem>>, vector<1x128x1xf32>
    %16 = vector.shape_cast %15 : vector<1x128x1xf32> to vector<128x1xf32>
    %cst_13 = arith.constant 0.000000e+00 : f32
    %17 = vector.broadcast %cst_13 : f32 to vector<128x1xf32>
    %18 = arith.select %14, %16, %17 : vector<128x1xf32>
    %19 = tpu.iota {dimensions = array<i32: 1>} : vector<1x128xi32>
    %c0_14 = arith.constant 0 : index
    %c0_15 = arith.constant 0 : index
    %c0_16 = arith.constant 0 : index
    %20 = vector.load %arg2[%c0_14, %c0_15, %c0_16] : memref<1x128x128xf32, #tpu.memory_space<vmem>>, vector<1x128x128xf32>
    %21 = vector.shape_cast %20 : vector<1x128x128xf32> to vector<128x128xf32>
    %c128_i32_17 = arith.constant 128 : i32
    %22 = arith.muli %arg1, %c128_i32_17 : i32
    %23 = vector.broadcast %22 : i32 to vector<1x128xi32>
    %24 = arith.addi %19, %23 : vector<1x128xi32>
    %c0_i32_18 = arith.constant 0 : i32
    %25 = vector.broadcast %c0_i32_18 : i32 to vector<1x128xi32>
    %26 = arith.addi %24, %25 : vector<1x128xi32>
    %c6_i32_19 = arith.constant 6 : i32
    %27 = vector.broadcast %c6_i32_19 : i32 to vector<1x128xi32>
    %28 = arith.cmpi slt, %26, %27 : vector<1x128xi32>
    %cst_20 = arith.constant 0.000000e+00 : f32
    %29 = vector.shape_cast %28 : vector<1x128xi1> to vector<1x128xi1>
    %30 = vector.broadcast %29 : vector<1x128xi1> to vector<128x128xi1>
    %31 = vector.broadcast %cst_20 : f32 to vector<128x128xf32>
    %32 = arith.select %30, %21, %31 : vector<128x128xi1>, vector<128x128xf32>
    %c1_i32_21 = arith.constant 1 : i32
    %33 = tpu.dynamic_rotate %32 by %c1_i32_21 dim 1 : vector<128x128xf32>, i32 -> vector<128x128xf32>
    %c0_i32_22 = arith.constant 0 : i32
    %34 = vector.broadcast %c0_i32_22 : i32 to vector<1x128xi32>
    %35 = arith.cmpi eq, %19, %34 : vector<1x128xi32>
    %36 = vector.shape_cast %35 : vector<1x128xi1> to vector<1x128xi1>
    %37 = vector.broadcast %36 : vector<1x128xi1> to vector<128x128xi1>
    %38 = vector.shape_cast %11 : vector<128x1xf32> to vector<128x1xf32>
    %39 = vector.broadcast %38 : vector<128x1xf32> to vector<128x128xf32>
    %40 = arith.select %37, %39, %33 : vector<128x128xi1>, vector<128x128xf32>
    %c127_i32 = arith.constant 127 : i32
    %41 = tpu.dynamic_rotate %32 by %c127_i32 dim 1 : vector<128x128xf32>, i32 -> vector<128x128xf32>
    %c127_i32_23 = arith.constant 127 : i32
    %42 = vector.broadcast %c127_i32_23 : i32 to vector<1x128xi32>
    %43 = arith.cmpi eq, %19, %42 : vector<1x128xi32>
    %44 = vector.shape_cast %43 : vector<1x128xi1> to vector<1x128xi1>
    %45 = vector.broadcast %44 : vector<1x128xi1> to vector<128x128xi1>
    %46 = vector.shape_cast %18 : vector<128x1xf32> to vector<128x1xf32>
    %47 = vector.broadcast %46 : vector<128x1xf32> to vector<128x128xf32>
    %48 = arith.select %45, %47, %41 : vector<128x128xi1>, vector<128x128xf32>
    %49 = vector.broadcast %1 : vector<128x1xf32> to vector<128x128xf32>
    %50 = arith.mulf %40, %49 : vector<128x128xf32>
    %51 = vector.broadcast %6 : vector<128x1xf32> to vector<128x128xf32>
    %52 = arith.addf %50, %51 : vector<128x128xf32>
    %53 = vector.broadcast %3 : vector<128x1xf32> to vector<128x128xf32>
    %54 = arith.mulf %32, %53 : vector<128x128xf32>
    %55 = arith.addf %52, %54 : vector<128x128xf32>
    %56 = vector.broadcast %5 : vector<128x1xf32> to vector<128x128xf32>
    %57 = arith.mulf %48, %56 : vector<128x128xf32>
    %58 = arith.addf %55, %57 : vector<128x128xf32>
    %c0_24 = arith.constant 0 : index
    %c0_25 = arith.constant 0 : index
    %c0_26 = arith.constant 0 : index
    %59 = vector.load %arg7[%c0_24, %c0_25, %c0_26] : memref<1x128x128xf32, #tpu.memory_space<vmem>>, vector<1x128x128xf32>
    %60 = vector.shape_cast %59 : vector<1x128x128xf32> to vector<128x128xf32>
    %61 = vector.shape_cast %58 : vector<128x128xf32> to vector<1x128x128xf32>
    tpu.vector_store %arg7[%c0_24, %c0_25, %c0_26], %61 {strides = array<i32>} : memref<1x128x128xf32, #tpu.memory_space<vmem>>, vector<1x128x128xf32>,
    return
  }
  func.func @transform_0(%arg0: i32, %arg1: i32) -> (i32, i32, i32) {
    %c0_i32 = arith.constant 0 : i32
    %c0_i32_0 = arith.constant 0 : i32
    return %arg0, %c0_i32, %arg1 : i32, i32, i32
  }
  func.func @transform_1(%arg0: i32, %arg1: i32) -> (i32, i32, i32) {
    %c1_i32 = arith.constant 1 : i32
    %0 = arith.muli %arg1, %c1_i32 : i32
    %c1_i32_0 = arith.constant 1 : i32
    %1 = arith.subi %0, %c1_i32_0 : i32
    %c0_i32 = arith.constant 0 : i32
    %2 = arith.maxsi %1, %c0_i32 : i32
    %c0_i32_1 = arith.constant 0 : i32
    %c0_i32_2 = arith.constant 0 : i32
    return %arg0, %c0_i32_1, %2 : i32, i32, i32
  }
  func.func @transform_2(%arg0: i32, %arg1: i32) -> (i32, i32, i32) {
    %c1_i32 = arith.constant 1 : i32
    %0 = arith.addi %arg1, %c1_i32 : i32
    %c1_i32_0 = arith.constant 1 : i32
    %1 = arith.muli %0, %c1_i32_0 : i32
    %c0_i32 = arith.constant 0 : i32
    %2 = arith.minsi %1, %c0_i32 : i32
    %c0_i32_1 = arith.constant 0 : i32
    %c0_i32_2 = arith.constant 0 : i32
    return %arg0, %c0_i32_1, %2 : i32, i32, i32
  }
  func.func @transform_3(%arg0: i32, %arg1: i32) -> (i32, i32, i32) {
    %c0_i32 = arith.constant 0 : i32
    %c0_i32_0 = arith.constant 0 : i32
    %c0_i32_1 = arith.constant 0 : i32
    %c0_i32_2 = arith.constant 0 : i32
    return %c0_i32, %c0_i32_0, %c0_i32_1 : i32, i32, i32
  }
  func.func @transform_4(%arg0: i32, %arg1: i32) -> (i32, i32) {
    %c0_i32 = arith.constant 0 : i32
    %c0_i32_0 = arith.constant 0 : i32
    %c0_i32_1 = arith.constant 0 : i32
    return %c0_i32, %c0_i32_0 : i32, i32
  }
  func.func @transform_5(%arg0: i32, %arg1: i32) -> (i32, i32, i32) {
    %c0_i32 = arith.constant 0 : i32
    %c0_i32_0 = arith.constant 0 : i32
    return %arg0, %c0_i32, %arg1 : i32, i32, i32
  }
}

</mosaic_0001>

<llo_original>
// kernel: tpu_custom_call.1
$region0: #{tpu_custom_call.1}
  #allocation0 [shape = 'u32[]', space=smem, size = 0x4, offset = 0x4, fixed_abs, tag = 'smem constant byte address 0x4 - core index']
  #allocation1 [shape = 'u32[72,128]{1,0:T(1,128)}', space=vmem, size = 0x9000, scoped, tag = 'internal scratch']
  %s0 = inlined_call_operand.vmem [shape: f32[1,128,6], index: 0, kind: input, shape index: {}]
  %s1 = inlined_call_operand.vmem [shape: f32[1,128,6], index: 1, kind: input, shape index: {}]
  %s2 = inlined_call_operand.vmem [shape: f32[1,128,6], index: 2, kind: input, shape index: {}]
  %s3 = inlined_call_operand.vmem [shape: f32[3,128,1], index: 3, kind: input, shape index: {}]
  %s4 = inlined_call_operand.vmem [shape: f32[128,1], index: 4, kind: input, shape index: {}]
  %s5 = inlined_call_operand.vmem [shape: f32[1,128,6], index: 5, kind: output, shape index: {}]
  %s6 = sld [smem:[#allocation0]]
  $region30: #{tpu_custom_call.1} parent=0
    _
  %s8 = ssub.s32 1, %s6
  %s9 = scalar_select 0, %s8, %s6
  // Predicated region
  $region2: #{tpu_custom_call.1} parent=0 // pred_check
    _
  $region3: #{tpu_custom_call.1} parent=0 // pred_check_branch
    %11 = sbr.rel (0) target = $region5
  $region4: #{tpu_custom_call.1} parent=0 // pred_region
    _
  $region5: #{tpu_custom_call.1} parent=0 // pred_fallthru
    _
  // Predicated region
  $region6: #{tpu_custom_call.1} parent=0 // pred_check
    _
  $region7: #{tpu_custom_call.1} parent=0 // pred_check_branch
    %13 = sbr.rel (0) target = $region9
  $region8: #{tpu_custom_call.1} parent=0 // pred_region
    %s14 = ssub.s32 0, 1
    %p15 = scmp.gt.s32.totalorder %s14, 0
    %s16 = scalar_select %p15, %s14, 0
    %p17 = scmp.lt.s32.totalorder %s16, 0
    %s18 = scalar_select %p17, %s16, 0
    %s19 = smul.addr %s18, 8
    %s20 = scalar_lea.vmem %s1, %s19
    %s21 = ssub.s32 0, 1
    %p22 = scmp.gt.s32.totalorder %s21, 0
    %s23 = scalar_select %p22, %s21, 0
  $region9: #{tpu_custom_call.1} parent=0 // pred_fallthru
    _
  // Predicated region
  $region10: #{tpu_custom_call.1} parent=0 // pred_check
    _
  $region11: #{tpu_custom_call.1} parent=0 // pred_check_branch
    %25 = sbr.rel (0) target = $region13
  $region12: #{tpu_custom_call.1} parent=0 // pred_region
    %s26 = sadd.s32 0, 1
    %p27 = scmp.lt.s32.totalorder %s26, 0
    %s28 = scalar_select %p27, %s26, 0
    %p29 = scmp.lt.s32.totalorder %s28, 0
    %s30 = scalar_select %p29, %s28, 0
    %s31 = smul.addr %s30, 8
    %s32 = scalar_lea.vmem %s2, %s31
    %s33 = sadd.s32 0, 1
    %p34 = scmp.lt.s32.totalorder %s33, 0
    %s35 = scalar_select %p34, %s33, 0
  $region13: #{tpu_custom_call.1} parent=0 // pred_fallthru
    _
  // Predicated region
  $region14: #{tpu_custom_call.1} parent=0 // pred_check
    _
  $region15: #{tpu_custom_call.1} parent=0 // pred_check_branch
    %37 = sbr.rel (0) target = $region17
  $region16: #{tpu_custom_call.1} parent=0 // pred_region
    _
  $region17: #{tpu_custom_call.1} parent=0 // pred_fallthru
    _
  // Predicated region
  $region18: #{tpu_custom_call.1} parent=0 // pred_check
    _
  $region19: #{tpu_custom_call.1} parent=0 // pred_check_branch
    %39 = sbr.rel (0) target = $region21
  $region20: #{tpu_custom_call.1} parent=0 // pred_region
    _
  $region21: #{tpu_custom_call.1} parent=0 // pred_fallthru
    _
  %s40 = ssub.s32 0, 1
  %p41 = scmp.gt.s32.totalorder %s40, 0
  %s42 = scalar_select %p41, %s40, 0
  %p43 = scmp.lt.s32.totalorder %s42, 0
  %s44 = scalar_select %p43, %s42, 0
  %s45 = smul.addr %s44, 8
  %s46 = scalar_lea.vmem %s1, %s45
  %s47 = sadd.s32 0, 1
  %p48 = scmp.lt.s32.totalorder %s47, 0
  %s49 = scalar_select %p48, %s47, 0
  %p50 = scmp.lt.s32.totalorder %s49, 0
  %s51 = scalar_select %p50, %s49, 0
  %s52 = smul.addr %s51, 8
  %s53 = scalar_lea.vmem %s2, %s52
  %s54 = ssub.s32 0, 1
  %p55 = scmp.gt.s32.totalorder %s54, 0
  %s56 = scalar_select %p55, %s54, 0
  %p57 = scmp.lt.s32.totalorder %s56, 0
  %s58 = scalar_select %p57, %s56, 0
  %s59 = smul.addr %s58, 8
  %s60 = scalar_lea.vmem %s1, %s59
  %s61 = ssub.s32 0, 1
  %p62 = scmp.gt.s32.totalorder %s61, 0
  %s63 = scalar_select %p62, %s61, 0
  %s64 = sadd.s32 0, 1
  %p65 = scmp.lt.s32.totalorder %s64, 0
  %s66 = scalar_select %p65, %s64, 0
  %p67 = scmp.lt.s32.totalorder %s66, 0
  %s68 = scalar_select %p67, %s66, 0
  %s69 = smul.addr %s68, 8
  %s70 = scalar_lea.vmem %s2, %s69
  %s71 = sadd.s32 0, 1
  %p72 = scmp.lt.s32.totalorder %s71, 0
  %s73 = scalar_select %p72, %s71, 0
  %v74 = vld [vmem:[%s3] sm:$0xff]
  %v75 = vld [vmem:[%s3 + $0x8] sm:$0xff]
  %v76 = vld [vmem:[%s3 + $0x10] sm:$0xff]
  %v77 = vld [vmem:[%s3 + $0x18] sm:$0xff]
  %v78 = vld [vmem:[%s3 + $0x20] sm:$0xff]
  %v79 = vld [vmem:[%s3 + $0x28] sm:$0xff]
  %v80 = vld [vmem:[%s3 + $0x30] sm:$0xff]
  %v81 = vld [vmem:[%s3 + $0x38] sm:$0xff]
  %v82 = vld [vmem:[%s3 + $0x40] sm:$0xff]
  %v83 = vld [vmem:[%s3 + $0x48] sm:$0xff]
  %v84 = vld [vmem:[%s3 + $0x50] sm:$0xff]
  %v85 = vld [vmem:[%s3 + $0x58] sm:$0xff]
  %v86 = vld [vmem:[%s3 + $0x60] sm:$0xff]
  %v87 = vld [vmem:[%s3 + $0x68] sm:$0xff]
  %v88 = vld [vmem:[%s3 + $0x70] sm:$0xff]
  %v89 = vld [vmem:[%s3 + $0x78] sm:$0xff]
  %s90 = scalar_lea.vmem %s3, 128
  %v91 = vld [vmem:[%s90] sm:$0xff]
  %v92 = vld [vmem:[%s90 + $0x8] sm:$0xff]
  %v93 = vld [vmem:[%s90 + $0x10] sm:$0xff]
  %v94 = vld [vmem:[%s90 + $0x18] sm:$0xff]
  %v95 = vld [vmem:[%s90 + $0x20] sm:$0xff]
  %v96 = vld [vmem:[%s90 + $0x28] sm:$0xff]
  %v97 = vld [vmem:[%s90 + $0x30] sm:$0xff]
  %v98 = vld [vmem:[%s90 + $0x38] sm:$0xff]
  %v99 = vld [vmem:[%s90 + $0x40] sm:$0xff]
  %v100 = vld [vmem:[%s90 + $0x48] sm:$0xff]
  %v101 = vld [vmem:[%s90 + $0x50] sm:$0xff]
  %v102 = vld [vmem:[%s90 + $0x58] sm:$0xff]
  %v103 = vld [vmem:[%s90 + $0x60] sm:$0xff]
  %v104 = vld [vmem:[%s90 + $0x68] sm:$0xff]
  %v105 = vld [vmem:[%s90 + $0x70] sm:$0xff]
  %v106 = vld [vmem:[%s90 + $0x78] sm:$0xff]
  %s107 = scalar_lea.vmem %s3, 256
  %v108 = vld [vmem:[%s107] sm:$0xff]
  %v109 = vld [vmem:[%s107 + $0x8] sm:$0xff]
  %v110 = vld [vmem:[%s107 + $0x10] sm:$0xff]
  %v111 = vld [vmem:[%s107 + $0x18] sm:$0xff]
  %v112 = vld [vmem:[%s107 + $0x20] sm:$0xff]
  %v113 = vld [vmem:[%s107 + $0x28] sm:$0xff]
  %v114 = vld [vmem:[%s107 + $0x30] sm:$0xff]
  %v115 = vld [vmem:[%s107 + $0x38] sm:$0xff]
  %v116 = vld [vmem:[%s107 + $0x40] sm:$0xff]
  %v117 = vld [vmem:[%s107 + $0x48] sm:$0xff]
  %v118 = vld [vmem:[%s107 + $0x50] sm:$0xff]
  %v119 = vld [vmem:[%s107 + $0x58] sm:$0xff]
  %v120 = vld [vmem:[%s107 + $0x60] sm:$0xff]
  %v121 = vld [vmem:[%s107 + $0x68] sm:$0xff]
  %v122 = vld [vmem:[%s107 + $0x70] sm:$0xff]
  %v123 = vld [vmem:[%s107 + $0x78] sm:$0xff]
  %v124 = vld [vmem:[%s4] sm:$0xff]
  %v125 = vld [vmem:[%s4 + $0x8] sm:$0xff]
  %v126 = vld [vmem:[%s4 + $0x10] sm:$0xff]
  %v127 = vld [vmem:[%s4 + $0x18] sm:$0xff]
  %v128 = vld [vmem:[%s4 + $0x20] sm:$0xff]
  %v129 = vld [vmem:[%s4 + $0x28] sm:$0xff]
  %v130 = vld [vmem:[%s4 + $0x30] sm:$0xff]
  %v131 = vld [vmem:[%s4 + $0x38] sm:$0xff]
  %v132 = vld [vmem:[%s4 + $0x40] sm:$0xff]
  %v133 = vld [vmem:[%s4 + $0x48] sm:$0xff]
  %v134 = vld [vmem:[%s4 + $0x50] sm:$0xff]
  %v135 = vld [vmem:[%s4 + $0x58] sm:$0xff]
  %v136 = vld [vmem:[%s4 + $0x60] sm:$0xff]
  %v137 = vld [vmem:[%s4 + $0x68] sm:$0xff]
  %v138 = vld [vmem:[%s4 + $0x70] sm:$0xff]
  %v139 = vld [vmem:[%s4 + $0x78] sm:$0xff]
  %p140 = scmp.gt.s32.totalorder 0, 0
  %v141 = vld [vmem:[%s60] sm:$0xff]
  %v142 = vld [vmem:[%s60 + $0x8] sm:$0xff]
  %v143 = vld [vmem:[%s60 + $0x10] sm:$0xff]
  %v144 = vld [vmem:[%s60 + $0x18] sm:$0xff]
  %v145 = vld [vmem:[%s60 + $0x20] sm:$0xff]
  %v146 = vld [vmem:[%s60 + $0x28] sm:$0xff]
  %v147 = vld [vmem:[%s60 + $0x30] sm:$0xff]
  %v148 = vld [vmem:[%s60 + $0x38] sm:$0xff]
  %v149 = vld [vmem:[%s60 + $0x40] sm:$0xff]
  %v150 = vld [vmem:[%s60 + $0x48] sm:$0xff]
  %v151 = vld [vmem:[%s60 + $0x50] sm:$0xff]
  %v152 = vld [vmem:[%s60 + $0x58] sm:$0xff]
  %v153 = vld [vmem:[%s60 + $0x60] sm:$0xff]
  %v154 = vld [vmem:[%s60 + $0x68] sm:$0xff]
  %v155 = vld [vmem:[%s60 + $0x70] sm:$0xff]
  %v156 = vld [vmem:[%s60 + $0x78] sm:$0xff]
  %s157 = scalar_select %p140, 1, 0
  %v158 = vstv %s157
  %vm159 = vcmp.eq.s32.totalorder %v158, 1
  %v160 = vsel %vm159, %v141, 0.0
  %v161 = vsel %vm159, %v142, 0.0
  %v162 = vsel %vm159, %v143, 0.0
  %v163 = vsel %vm159, %v144, 0.0
  %v164 = vsel %vm159, %v145, 0.0
  %v165 = vsel %vm159, %v146, 0.0
  %v166 = vsel %vm159, %v147, 0.0
  %v167 = vsel %vm159, %v148, 0.0
  %v168 = vsel %vm159, %v149, 0.0
  %v169 = vsel %vm159, %v150, 0.0
  %v170 = vsel %vm159, %v151, 0.0
  %v171 = vsel %vm159, %v152, 0.0
  %v172 = vsel %vm159, %v153, 0.0
  %v173 = vsel %vm159, %v154, 0.0
  %v174 = vsel %vm159, %v155, 0.0
  %v175 = vsel %vm159, %v156, 0.0
  %s176 = sadd.s32 0, 1
  %s177 = smul.u32 %s176, 128
  %p178 = scmp.lt.s32.totalorder %s177, 6
  %v179 = vld [vmem:[%s70] sm:$0xff]
  %v180 = vld [vmem:[%s70 + $0x8] sm:$0xff]
  %v181 = vld [vmem:[%s70 + $0x10] sm:$0xff]
  %v182 = vld [vmem:[%s70 + $0x18] sm:$0xff]
  %v183 = vld [vmem:[%s70 + $0x20] sm:$0xff]
  %v184 = vld [vmem:[%s70 + $0x28] sm:$0xff]
  %v185 = vld [vmem:[%s70 + $0x30] sm:$0xff]
  %v186 = vld [vmem:[%s70 + $0x38] sm:$0xff]
  %v187 = vld [vmem:[%s70 + $0x40] sm:$0xff]
  %v188 = vld [vmem:[%s70 + $0x48] sm:$0xff]
  %v189 = vld [vmem:[%s70 + $0x50] sm:$0xff]
  %v190 = vld [vmem:[%s70 + $0x58] sm:$0xff]
  %v191 = vld [vmem:[%s70 + $0x60] sm:$0xff]
  %v192 = vld [vmem:[%s70 + $0x68] sm:$0xff]
  %v193 = vld [vmem:[%s70 + $0x70] sm:$0xff]
  %v194 = vld [vmem:[%s70 + $0x78] sm:$0xff]
  %s195 = scalar_select %p178, 1, 0
  %v196 = vstv %s195
  %vm197 = vcmp.eq.s32.totalorder %v196, 1
  %v198 = vsel %vm197, %v179, 0.0
  %v199 = vsel %vm197, %v180, 0.0
  %v200 = vsel %vm197, %v181, 0.0
  %v201 = vsel %vm197, %v182, 0.0
  %v202 = vsel %vm197, %v183, 0.0
  %v203 = vsel %vm197, %v184, 0.0
  %v204 = vsel %vm197, %v185, 0.0
  %v205 = vsel %vm197, %v186, 0.0
  %v206 = vsel %vm197, %v187, 0.0
  %v207 = vsel %vm197, %v188, 0.0
  %v208 = vsel %vm197, %v189, 0.0
  %v209 = vsel %vm197, %v190, 0.0
  %v210 = vsel %vm197, %v191, 0.0
  %v211 = vsel %vm197, %v192, 0.0
  %v212 = vsel %vm197, %v193, 0.0
  %v213 = vsel %vm197, %v194, 0.0
  %v214 = vlaneseq
  %v215 = vand.u32 %v214, 127
  %v216 = vld [vmem:[%s0] sm:$0xff]
  %v217 = vld [vmem:[%s0 + $0x8] sm:$0xff]
  %v218 = vld [vmem:[%s0 + $0x10] sm:$0xff]
  %v219 = vld [vmem:[%s0 + $0x18] sm:$0xff]
  %v220 = vld [vmem:[%s0 + $0x20] sm:$0xff]
  %v221 = vld [vmem:[%s0 + $0x28] sm:$0xff]
  %v222 = vld [vmem:[%s0 + $0x30] sm:$0xff]
  %v223 = vld [vmem:[%s0 + $0x38] sm:$0xff]
  %v224 = vld [vmem:[%s0 + $0x40] sm:$0xff]
  %v225 = vld [vmem:[%s0 + $0x48] sm:$0xff]
  %v226 = vld [vmem:[%s0 + $0x50] sm:$0xff]
  %v227 = vld [vmem:[%s0 + $0x58] sm:$0xff]
  %v228 = vld [vmem:[%s0 + $0x60] sm:$0xff]
  %v229 = vld [vmem:[%s0 + $0x68] sm:$0xff]
  %v230 = vld [vmem:[%s0 + $0x70] sm:$0xff]
  %v231 = vld [vmem:[%s0 + $0x78] sm:$0xff]
  %s232 = smul.u32 0, 128
  %v233 = vstv %s232
  %v234 = vadd.s32 %v215, %v233
  %vm235 = vcmp.lt.s32.totalorder %v234, 6
  %v236 = vsel %vm235, 1, 0
  %vm237 = vcmp.eq.s32.totalorder %v236, 1
  %v238 = vsel %vm237, %v216, 0.0
  %v239 = vsel %vm237, %v217, 0.0
  %v240 = vsel %vm237, %v218, 0.0
  %v241 = vsel %vm237, %v219, 0.0
  %v242 = vsel %vm237, %v220, 0.0
  %v243 = vsel %vm237, %v221, 0.0
  %v244 = vsel %vm237, %v222, 0.0
  %v245 = vsel %vm237, %v223, 0.0
  %v246 = vsel %vm237, %v224, 0.0
  %v247 = vsel %vm237, %v225, 0.0
  %v248 = vsel %vm237, %v226, 0.0
  %v249 = vsel %vm237, %v227, 0.0
  %v250 = vsel %vm237, %v228, 0.0
  %v251 = vsel %vm237, %v229, 0.0
  %v252 = vsel %vm237, %v230, 0.0
  %v253 = vsel %vm237, %v231, 0.0
  %254 = vrot.lane.b32.xlu0 %v238, 1
  %v255 = vpop.permute.xlu0 %254
  %256 = vrot.lane.b32.xlu0 %v239, 1
  %v257 = vpop.permute.xlu0 %256
  %258 = vrot.lane.b32.xlu0 %v240, 1
  %v259 = vpop.permute.xlu0 %258
  %260 = vrot.lane.b32.xlu0 %v241, 1
  %v261 = vpop.permute.xlu0 %260
  %262 = vrot.lane.b32.xlu0 %v242, 1
  %v263 = vpop.permute.xlu0 %262
  %264 = vrot.lane.b32.xlu0 %v243, 1
  %v265 = vpop.permute.xlu0 %264
  %266 = vrot.lane.b32.xlu0 %v244, 1
  %v267 = vpop.permute.xlu0 %266
  %268 = vrot.lane.b32.xlu0 %v245, 1
  %v269 = vpop.permute.xlu0 %268
  %270 = vrot.lane.b32.xlu0 %v246, 1
  %v271 = vpop.permute.xlu0 %270
  %272 = vrot.lane.b32.xlu0 %v247, 1
  %v273 = vpop.permute.xlu0 %272
  %274 = vrot.lane.b32.xlu0 %v248, 1
  %v275 = vpop.permute.xlu0 %274
  %276 = vrot.lane.b32.xlu0 %v249, 1
  %v277 = vpop.permute.xlu0 %276
  %278 = vrot.lane.b32.xlu0 %v250, 1
  %v279 = vpop.permute.xlu0 %278
  %280 = vrot.lane.b32.xlu0 %v251, 1
  %v281 = vpop.permute.xlu0 %280
  %282 = vrot.lane.b32.xlu0 %v252, 1
  %v283 = vpop.permute.xlu0 %282
  %284 = vrot.lane.b32.xlu0 %v253, 1
  %v285 = vpop.permute.xlu0 %284
  %vm286 = vcmp.eq.s32.totalorder %v215, 0
  %v287 = vsel %vm286, 1, 0
  %vm288 = vcmp.eq.s32.totalorder %v287, 1
  %290 = vset.pattern.permute.xlu0 127
  %291 = vperm.xlu0 %290, %v160
  %v292 = vpop.permute.xlu0 %291
  %295 = vset.pattern.permute.xlu0 127
  %296 = vperm.xlu0 %295, %v161
  %v297 = vpop.permute.xlu0 %296
  %300 = vset.pattern.permute.xlu0 127
  %301 = vperm.xlu0 %300, %v162
  %v302 = vpop.permute.xlu0 %301
  %305 = vset.pattern.permute.xlu0 127
  %306 = vperm.xlu0 %305, %v163
  %v307 = vpop.permute.xlu0 %306
  %310 = vset.pattern.permute.xlu0 127
  %311 = vperm.xlu0 %310, %v164
  %v312 = vpop.permute.xlu0 %311
  %315 = vset.pattern.permute.xlu0 127
  %316 = vperm.xlu0 %315, %v165
  %v317 = vpop.permute.xlu0 %316
  %320 = vset.pattern.permute.xlu0 127
  %321 = vperm.xlu0 %320, %v166
  %v322 = vpop.permute.xlu0 %321
  %325 = vset.pattern.permute.xlu0 127
  %326 = vperm.xlu0 %325, %v167
  %v327 = vpop.permute.xlu0 %326
  %330 = vset.pattern.permute.xlu0 127
  %331 = vperm.xlu0 %330, %v168
  %v332 = vpop.permute.xlu0 %331
  %335 = vset.pattern.permute.xlu0 127
  %336 = vperm.xlu0 %335, %v169
  %v337 = vpop.permute.xlu0 %336
  %340 = vset.pattern.permute.xlu0 127
  %341 = vperm.xlu0 %340, %v170
  %v342 = vpop.permute.xlu0 %341
  %345 = vset.pattern.permute.xlu0 127
  %346 = vperm.xlu0 %345, %v171
  %v347 = vpop.permute.xlu0 %346
  %350 = vset.pattern.permute.xlu0 127
  %351 = vperm.xlu0 %350, %v172
  %v352 = vpop.permute.xlu0 %351
  %355 = vset.pattern.permute.xlu0 127
  %356 = vperm.xlu0 %355, %v173
  %v357 = vpop.permute.xlu0 %356
  %360 = vset.pattern.permute.xlu0 127
  %361 = vperm.xlu0 %360, %v174
  %v362 = vpop.permute.xlu0 %361
  %365 = vset.pattern.permute.xlu0 127
  %366 = vperm.xlu0 %365, %v175
  %v367 = vpop.permute.xlu0 %366
  %v369 = vsel %vm288, %v292, %v255
  %v370 = vsel %vm288, %v297, %v257
  %v371 = vsel %vm288, %v302, %v259
  %v372 = vsel %vm288, %v307, %v261
  %v373 = vsel %vm288, %v312, %v263
  %v374 = vsel %vm288, %v317, %v265
  %v375 = vsel %vm288, %v322, %v267
  %v376 = vsel %vm288, %v327, %v269
  %v377 = vsel %vm288, %v332, %v271
  %v378 = vsel %vm288, %v337, %v273
  %v379 = vsel %vm288, %v342, %v275
  %v380 = vsel %vm288, %v347, %v277
  %v381 = vsel %vm288, %v352, %v279
  %v382 = vsel %vm288, %v357, %v281
  %v383 = vsel %vm288, %v362, %v283
  %v384 = vsel %vm288, %v367, %v285
  %385 = vrot.lane.b32.xlu0 %v238, 127
  %v386 = vpop.permute.xlu0 %385
  %387 = vrot.lane.b32.xlu0 %v239, 127
  %v388 = vpop.permute.xlu0 %387
  %389 = vrot.lane.b32.xlu0 %v240, 127
  %v390 = vpop.permute.xlu0 %389
  %391 = vrot.lane.b32.xlu0 %v241, 127
  %v392 = vpop.permute.xlu0 %391
  %393 = vrot.lane.b32.xlu0 %v242, 127
  %v394 = vpop.permute.xlu0 %393
  %395 = vrot.lane.b32.xlu0 %v243, 127
  %v396 = vpop.permute.xlu0 %395
  %397 = vrot.lane.b32.xlu0 %v244, 127
  %v398 = vpop.permute.xlu0 %397
  %399 = vrot.lane.b32.xlu0 %v245, 127
  %v400 = vpop.permute.xlu0 %399
  %401 = vrot.lane.b32.xlu0 %v246, 127
  %v402 = vpop.permute.xlu0 %401
  %403 = vrot.lane.b32.xlu0 %v247, 127
  %v404 = vpop.permute.xlu0 %403
  %405 = vrot.lane.b32.xlu0 %v248, 127
  %v406 = vpop.permute.xlu0 %405
  %407 = vrot.lane.b32.xlu0 %v249, 127
  %v408 = vpop.permute.xlu0 %407
  %409 = vrot.lane.b32.xlu0 %v250, 127
  %v410 = vpop.permute.xlu0 %409
  %411 = vrot.lane.b32.xlu0 %v251, 127
  %v412 = vpop.permute.xlu0 %411
  %413 = vrot.lane.b32.xlu0 %v252, 127
  %v414 = vpop.permute.xlu0 %413
  %415 = vrot.lane.b32.xlu0 %v253, 127
  %v416 = vpop.permute.xlu0 %415
  %vm417 = vcmp.eq.s32.totalorder %v215, 127
  %v418 = vsel %vm417, 1, 0
  %vm419 = vcmp.eq.s32.totalorder %v418, 1
  %421 = vset.pattern.permute.xlu0 0
  %422 = vperm.xlu0 %421, %v198
  %v423 = vpop.permute.xlu0 %422
  %426 = vset.pattern.permute.xlu0 0
  %427 = vperm.xlu0 %426, %v199
  %v428 = vpop.permute.xlu0 %427
  %431 = vset.pattern.permute.xlu0 0
  %432 = vperm.xlu0 %431, %v200
  %v433 = vpop.permute.xlu0 %432
  %436 = vset.pattern.permute.xlu0 0
  %437 = vperm.xlu0 %436, %v201
  %v438 = vpop.permute.xlu0 %437
  %441 = vset.pattern.permute.xlu0 0
  %442 = vperm.xlu0 %441, %v202
  %v443 = vpop.permute.xlu0 %442
  %446 = vset.pattern.permute.xlu0 0
  %447 = vperm.xlu0 %446, %v203
  %v448 = vpop.permute.xlu0 %447
  %451 = vset.pattern.permute.xlu0 0
  %452 = vperm.xlu0 %451, %v204
  %v453 = vpop.permute.xlu0 %452
  %456 = vset.pattern.permute.xlu0 0
  %457 = vperm.xlu0 %456, %v205
  %v458 = vpop.permute.xlu0 %457
  %461 = vset.pattern.permute.xlu0 0
  %462 = vperm.xlu0 %461, %v206
  %v463 = vpop.permute.xlu0 %462
  %466 = vset.pattern.permute.xlu0 0
  %467 = vperm.xlu0 %466, %v207
  %v468 = vpop.permute.xlu0 %467
  %471 = vset.pattern.permute.xlu0 0
  %472 = vperm.xlu0 %471, %v208
  %v473 = vpop.permute.xlu0 %472
  %476 = vset.pattern.permute.xlu0 0
  %477 = vperm.xlu0 %476, %v209
  %v478 = vpop.permute.xlu0 %477
  %481 = vset.pattern.permute.xlu0 0
  %482 = vperm.xlu0 %481, %v210
  %v483 = vpop.permute.xlu0 %482
  %486 = vset.pattern.permute.xlu0 0
  %487 = vperm.xlu0 %486, %v211
  %v488 = vpop.permute.xlu0 %487
  %491 = vset.pattern.permute.xlu0 0
  %492 = vperm.xlu0 %491, %v212
  %v493 = vpop.permute.xlu0 %492
  %496 = vset.pattern.permute.xlu0 0
  %497 = vperm.xlu0 %496, %v213
  %v498 = vpop.permute.xlu0 %497
  %v500 = vsel %vm419, %v423, %v386
  %v501 = vsel %vm419, %v428, %v388
  %v502 = vsel %vm419, %v433, %v390
  %v503 = vsel %vm419, %v438, %v392
  %v504 = vsel %vm419, %v443, %v394
  %v505 = vsel %vm419, %v448, %v396
  %v506 = vsel %vm419, %v453, %v398
  %v507 = vsel %vm419, %v458, %v400
  %v508 = vsel %vm419, %v463, %v402
  %v509 = vsel %vm419, %v468, %v404
  %v510 = vsel %vm419, %v473, %v406
  %v511 = vsel %vm419, %v478, %v408
  %v512 = vsel %vm419, %v483, %v410
  %v513 = vsel %vm419, %v488, %v412
  %v514 = vsel %vm419, %v493, %v414
  %v515 = vsel %vm419, %v498, %v416
  %517 = vset.pattern.permute.xlu0 0
  %518 = vperm.xlu0 %517, %v74
  %v519 = vpop.permute.xlu0 %518
  %522 = vset.pattern.permute.xlu0 0
  %523 = vperm.xlu0 %522, %v75
  %v524 = vpop.permute.xlu0 %523
  %527 = vset.pattern.permute.xlu0 0
  %528 = vperm.xlu0 %527, %v76
  %v529 = vpop.permute.xlu0 %528
  %532 = vset.pattern.permute.xlu0 0
  %533 = vperm.xlu0 %532, %v77
  %v534 = vpop.permute.xlu0 %533
  %537 = vset.pattern.permute.xlu0 0
  %538 = vperm.xlu0 %537, %v78
  %v539 = vpop.permute.xlu0 %538
  %542 = vset.pattern.permute.xlu0 0
  %543 = vperm.xlu0 %542, %v79
  %v544 = vpop.permute.xlu0 %543
  %547 = vset.pattern.permute.xlu0 0
  %548 = vperm.xlu0 %547, %v80
  %v549 = vpop.permute.xlu0 %548
  %552 = vset.pattern.permute.xlu0 0
  %553 = vperm.xlu0 %552, %v81
  %v554 = vpop.permute.xlu0 %553
  %557 = vset.pattern.permute.xlu0 0
  %558 = vperm.xlu0 %557, %v82
  %v559 = vpop.permute.xlu0 %558
  %562 = vset.pattern.permute.xlu0 0
  %563 = vperm.xlu0 %562, %v83
  %v564 = vpop.permute.xlu0 %563
  %567 = vset.pattern.permute.xlu0 0
  %568 = vperm.xlu0 %567, %v84
  %v569 = vpop.permute.xlu0 %568
  %572 = vset.pattern.permute.xlu0 0
  %573 = vperm.xlu0 %572, %v85
  %v574 = vpop.permute.xlu0 %573
  %577 = vset.pattern.permute.xlu0 0
  %578 = vperm.xlu0 %577, %v86
  %v579 = vpop.permute.xlu0 %578
  %582 = vset.pattern.permute.xlu0 0
  %583 = vperm.xlu0 %582, %v87
  %v584 = vpop.permute.xlu0 %583
  %587 = vset.pattern.permute.xlu0 0
  %588 = vperm.xlu0 %587, %v88
  %v589 = vpop.permute.xlu0 %588
  %592 = vset.pattern.permute.xlu0 0
  %593 = vperm.xlu0 %592, %v89
  %v594 = vpop.permute.xlu0 %593
  %v596 = vmul.f32 %v369, %v519
  %v597 = vmul.f32 %v370, %v524
  %v598 = vmul.f32 %v371, %v529
  %v599 = vmul.f32 %v372, %v534
  %v600 = vmul.f32 %v373, %v539
  %v601 = vmul.f32 %v374, %v544
  %v602 = vmul.f32 %v375, %v549
  %v603 = vmul.f32 %v376, %v554
  %v604 = vmul.f32 %v377, %v559
  %v605 = vmul.f32 %v378, %v564
  %v606 = vmul.f32 %v379, %v569
  %v607 = vmul.f32 %v380, %v574
  %v608 = vmul.f32 %v381, %v579
  %v609 = vmul.f32 %v382, %v584
  %v610 = vmul.f32 %v383, %v589
  %v611 = vmul.f32 %v384, %v594
  %613 = vset.pattern.permute.xlu0 0
  %614 = vperm.xlu0 %613, %v124
  %v615 = vpop.permute.xlu0 %614
  %618 = vset.pattern.permute.xlu0 0
  %619 = vperm.xlu0 %618, %v125
  %v620 = vpop.permute.xlu0 %619
  %623 = vset.pattern.permute.xlu0 0
  %624 = vperm.xlu0 %623, %v126
  %v625 = vpop.permute.xlu0 %624
  %628 = vset.pattern.permute.xlu0 0
  %629 = vperm.xlu0 %628, %v127
  %v630 = vpop.permute.xlu0 %629
  %633 = vset.pattern.permute.xlu0 0
  %634 = vperm.xlu0 %633, %v128
  %v635 = vpop.permute.xlu0 %634
  %638 = vset.pattern.permute.xlu0 0
  %639 = vperm.xlu0 %638, %v129
  %v640 = vpop.permute.xlu0 %639
  %643 = vset.pattern.permute.xlu0 0
  %644 = vperm.xlu0 %643, %v130
  %v645 = vpop.permute.xlu0 %644
  %648 = vset.pattern.permute.xlu0 0
  %649 = vperm.xlu0 %648, %v131
  %v650 = vpop.permute.xlu0 %649
  %653 = vset.pattern.permute.xlu0 0
  %654 = vperm.xlu0 %653, %v132
  %v655 = vpop.permute.xlu0 %654
  %658 = vset.pattern.permute.xlu0 0
  %659 = vperm.xlu0 %658, %v133
  %v660 = vpop.permute.xlu0 %659
  %663 = vset.pattern.permute.xlu0 0
  %664 = vperm.xlu0 %663, %v134
  %v665 = vpop.permute.xlu0 %664
  %668 = vset.pattern.permute.xlu0 0
  %669 = vperm.xlu0 %668, %v135
  %v670 = vpop.permute.xlu0 %669
  %673 = vset.pattern.permute.xlu0 0
  %674 = vperm.xlu0 %673, %v136
  %v675 = vpop.permute.xlu0 %674
  %678 = vset.pattern.permute.xlu0 0
  %679 = vperm.xlu0 %678, %v137
  %v680 = vpop.permute.xlu0 %679
  %683 = vset.pattern.permute.xlu0 0
  %684 = vperm.xlu0 %683, %v138
  %v685 = vpop.permute.xlu0 %684
  %688 = vset.pattern.permute.xlu0 0
  %689 = vperm.xlu0 %688, %v139
  %v690 = vpop.permute.xlu0 %689
  %v692 = vadd.f32 %v596, %v615
  %v693 = vadd.f32 %v597, %v620
  %v694 = vadd.f32 %v598, %v625
  %v695 = vadd.f32 %v599, %v630
  %v696 = vadd.f32 %v600, %v635
  %v697 = vadd.f32 %v601, %v640
  %v698 = vadd.f32 %v602, %v645
  %v699 = vadd.f32 %v603, %v650
  %v700 = vadd.f32 %v604, %v655
  %v701 = vadd.f32 %v605, %v660
  %v702 = vadd.f32 %v606, %v665
  %v703 = vadd.f32 %v607, %v670
  %v704 = vadd.f32 %v608, %v675
  %v705 = vadd.f32 %v609, %v680
  %v706 = vadd.f32 %v610, %v685
  %v707 = vadd.f32 %v611, %v690
  %709 = vset.pattern.permute.xlu0 0
  %710 = vperm.xlu0 %709, %v91
  %v711 = vpop.permute.xlu0 %710
  %714 = vset.pattern.permute.xlu0 0
  %715 = vperm.xlu0 %714, %v92
  %v716 = vpop.permute.xlu0 %715
  %719 = vset.pattern.permute.xlu0 0
  %720 = vperm.xlu0 %719, %v93
  %v721 = vpop.permute.xlu0 %720
  %724 = vset.pattern.permute.xlu0 0
  %725 = vperm.xlu0 %724, %v94
  %v726 = vpop.permute.xlu0 %725
  %729 = vset.pattern.permute.xlu0 0
  %730 = vperm.xlu0 %729, %v95
  %v731 = vpop.permute.xlu0 %730
  %734 = vset.pattern.permute.xlu0 0
  %735 = vperm.xlu0 %734, %v96
  %v736 = vpop.permute.xlu0 %735
  %739 = vset.pattern.permute.xlu0 0
  %740 = vperm.xlu0 %739, %v97
  %v741 = vpop.permute.xlu0 %740
  %744 = vset.pattern.permute.xlu0 0
  %745 = vperm.xlu0 %744, %v98
  %v746 = vpop.permute.xlu0 %745
  %749 = vset.pattern.permute.xlu0 0
  %750 = vperm.xlu0 %749, %v99
  %v751 = vpop.permute.xlu0 %750
  %754 = vset.pattern.permute.xlu0 0
  %755 = vperm.xlu0 %754, %v100
  %v756 = vpop.permute.xlu0 %755
  %759 = vset.pattern.permute.xlu0 0
  %760 = vperm.xlu0 %759, %v101
  %v761 = vpop.permute.xlu0 %760
  %764 = vset.pattern.permute.xlu0 0
  %765 = vperm.xlu0 %764, %v102
  %v766 = vpop.permute.xlu0 %765
  %769 = vset.pattern.permute.xlu0 0
  %770 = vperm.xlu0 %769, %v103
  %v771 = vpop.permute.xlu0 %770
  %774 = vset.pattern.permute.xlu0 0
  %775 = vperm.xlu0 %774, %v104
  %v776 = vpop.permute.xlu0 %775
  %779 = vset.pattern.permute.xlu0 0
  %780 = vperm.xlu0 %779, %v105
  %v781 = vpop.permute.xlu0 %780
  %784 = vset.pattern.permute.xlu0 0
  %785 = vperm.xlu0 %784, %v106
  %v786 = vpop.permute.xlu0 %785
  %v788 = vmul.f32 %v238, %v711
  %v789 = vmul.f32 %v239, %v716
  %v790 = vmul.f32 %v240, %v721
  %v791 = vmul.f32 %v241, %v726
  %v792 = vmul.f32 %v242, %v731
  %v793 = vmul.f32 %v243, %v736
  %v794 = vmul.f32 %v244, %v741
  %v795 = vmul.f32 %v245, %v746
  %v796 = vmul.f32 %v246, %v751
  %v797 = vmul.f32 %v247, %v756
  %v798 = vmul.f32 %v248, %v761
  %v799 = vmul.f32 %v249, %v766
  %v800 = vmul.f32 %v250, %v771
  %v801 = vmul.f32 %v251, %v776
  %v802 = vmul.f32 %v252, %v781
  %v803 = vmul.f32 %v253, %v786
  %v804 = vadd.f32 %v692, %v788
  %v805 = vadd.f32 %v693, %v789
  %v806 = vadd.f32 %v694, %v790
  %v807 = vadd.f32 %v695, %v791
  %v808 = vadd.f32 %v696, %v792
  %v809 = vadd.f32 %v697, %v793
  %v810 = vadd.f32 %v698, %v794
  %v811 = vadd.f32 %v699, %v795
  %v812 = vadd.f32 %v700, %v796
  %v813 = vadd.f32 %v701, %v797
  %v814 = vadd.f32 %v702, %v798
  %v815 = vadd.f32 %v703, %v799
  %v816 = vadd.f32 %v704, %v800
  %v817 = vadd.f32 %v705, %v801
  %v818 = vadd.f32 %v706, %v802
  %v819 = vadd.f32 %v707, %v803
  %821 = vset.pattern.permute.xlu0 0
  %822 = vperm.xlu0 %821, %v108
  %v823 = vpop.permute.xlu0 %822
  %826 = vset.pattern.permute.xlu0 0
  %827 = vperm.xlu0 %826, %v109
  %v828 = vpop.permute.xlu0 %827
  %831 = vset.pattern.permute.xlu0 0
  %832 = vperm.xlu0 %831, %v110
  %v833 = vpop.permute.xlu0 %832
  %836 = vset.pattern.permute.xlu0 0
  %837 = vperm.xlu0 %836, %v111
  %v838 = vpop.permute.xlu0 %837
  %841 = vset.pattern.permute.xlu0 0
  %842 = vperm.xlu0 %841, %v112
  %v843 = vpop.permute.xlu0 %842
  %846 = vset.pattern.permute.xlu0 0
  %847 = vperm.xlu0 %846, %v113
  %v848 = vpop.permute.xlu0 %847
  %851 = vset.pattern.permute.xlu0 0
  %852 = vperm.xlu0 %851, %v114
  %v853 = vpop.permute.xlu0 %852
  %856 = vset.pattern.permute.xlu0 0
  %857 = vperm.xlu0 %856, %v115
  %v858 = vpop.permute.xlu0 %857
  %861 = vset.pattern.permute.xlu0 0
  %862 = vperm.xlu0 %861, %v116
  %v863 = vpop.permute.xlu0 %862
  %866 = vset.pattern.permute.xlu0 0
  %867 = vperm.xlu0 %866, %v117
  %v868 = vpop.permute.xlu0 %867
  %871 = vset.pattern.permute.xlu0 0
  %872 = vperm.xlu0 %871, %v118
  %v873 = vpop.permute.xlu0 %872
  %876 = vset.pattern.permute.xlu0 0
  %877 = vperm.xlu0 %876, %v119
  %v878 = vpop.permute.xlu0 %877
  %881 = vset.pattern.permute.xlu0 0
  %882 = vperm.xlu0 %881, %v120
  %v883 = vpop.permute.xlu0 %882
  %886 = vset.pattern.permute.xlu0 0
  %887 = vperm.xlu0 %886, %v121
  %v888 = vpop.permute.xlu0 %887
  %891 = vset.pattern.permute.xlu0 0
  %892 = vperm.xlu0 %891, %v122
  %v893 = vpop.permute.xlu0 %892
  %896 = vset.pattern.permute.xlu0 0
  %897 = vperm.xlu0 %896, %v123
  %v898 = vpop.permute.xlu0 %897
  %v900 = vmul.f32 %v500, %v823
  %v901 = vmul.f32 %v501, %v828
  %v902 = vmul.f32 %v502, %v833
  %v903 = vmul.f32 %v503, %v838
  %v904 = vmul.f32 %v504, %v843
  %v905 = vmul.f32 %v505, %v848
  %v906 = vmul.f32 %v506, %v853
  %v907 = vmul.f32 %v507, %v858
  %v908 = vmul.f32 %v508, %v863
  %v909 = vmul.f32 %v509, %v868
  %v910 = vmul.f32 %v510, %v873
  %v911 = vmul.f32 %v511, %v878
  %v912 = vmul.f32 %v512, %v883
  %v913 = vmul.f32 %v513, %v888
  %v914 = vmul.f32 %v514, %v893
  %v915 = vmul.f32 %v515, %v898
  %v916 = vadd.f32 %v804, %v900
  %v917 = vadd.f32 %v805, %v901
  %v918 = vadd.f32 %v806, %v902
  %v919 = vadd.f32 %v807, %v903
  %v920 = vadd.f32 %v808, %v904
  %v921 = vadd.f32 %v809, %v905
  %v922 = vadd.f32 %v810, %v906
  %v923 = vadd.f32 %v811, %v907
  %v924 = vadd.f32 %v812, %v908
  %v925 = vadd.f32 %v813, %v909
  %v926 = vadd.f32 %v814, %v910
  %v927 = vadd.f32 %v815, %v911
  %v928 = vadd.f32 %v816, %v912
  %v929 = vadd.f32 %v817, %v913
  %v930 = vadd.f32 %v818, %v914
  %v931 = vadd.f32 %v819, %v915
  %932 = vst [vmem:[%s5] sm:$0xff] %v916
  %933 = vst [vmem:[%s5 + $0x8] sm:$0xff] %v917
  %934 = vst [vmem:[%s5 + $0x10] sm:$0xff] %v918
  %935 = vst [vmem:[%s5 + $0x18] sm:$0xff] %v919
  %936 = vst [vmem:[%s5 + $0x20] sm:$0xff] %v920
  %937 = vst [vmem:[%s5 + $0x28] sm:$0xff] %v921
  %938 = vst [vmem:[%s5 + $0x30] sm:$0xff] %v922
  %939 = vst [vmem:[%s5 + $0x38] sm:$0xff] %v923
  %940 = vst [vmem:[%s5 + $0x40] sm:$0xff] %v924
  %941 = vst [vmem:[%s5 + $0x48] sm:$0xff] %v925
  %942 = vst [vmem:[%s5 + $0x50] sm:$0xff] %v926
  %943 = vst [vmem:[%s5 + $0x58] sm:$0xff] %v927
  %944 = vst [vmem:[%s5 + $0x60] sm:$0xff] %v928
  %945 = vst [vmem:[%s5 + $0x68] sm:$0xff] %v929
  %946 = vst [vmem:[%s5 + $0x70] sm:$0xff] %v930
  %947 = vst [vmem:[%s5 + $0x78] sm:$0xff] %v931
  // Predicated region
  $region22: #{tpu_custom_call.1} parent=0 // pred_check
    _
  $region23: #{tpu_custom_call.1} parent=0 // pred_check_branch
    %949 = sbr.rel (0) target = $region25
  $region24: #{tpu_custom_call.1} parent=0 // pred_region
    _
  $region25: #{tpu_custom_call.1} parent=0 // pred_fallthru
    _
  // Predicated region
  $region26: #{tpu_custom_call.1} parent=0 // pred_check
    _
  $region27: #{tpu_custom_call.1} parent=0 // pred_check_branch
    %951 = sbr.rel (0) target = $region29
  $region28: #{tpu_custom_call.1} parent=0 // pred_region
    _
  $region29: #{tpu_custom_call.1} parent=0 // pred_fallthru
    _

</llo_original>
